<compile_context>
chip_gen: v7x
topology: tpu7x:2x2x1
jax: 0.10.0
libtpu: 0.0.40
codegen_flags: <defaults>
</compile_context>

<pallas_src>
import jax
import jax.numpy as jnp
from jax.experimental import pallas as pl
from jax.experimental.pallas import tpu as pltpu

_MIB = 1024 * 1024


def _h_sigmoid_kernel(x_ref, o_ref):
    x = x_ref[...]
    # relu6(x + 3) / 6 == clamp(x + 3, 0, 6) * (1/6)
    o_ref[...] = (jnp.clip(x + 3.0, 0.0, 6.0) * (1.0 / 6.0)).astype(o_ref.dtype)


def _h_sigmoid_jax(x):
    return (jnp.clip(x + 3.0, 0.0, 6.0) * (1.0 / 6.0)).astype(x.dtype)


def _target_tile_bytes():
    # ~VMEM/16 per buffer: pipeline double-buffers input AND output,
    # so ~4x this is live. Caps: 2 MiB (amortize 0.35us/step) .. 8 MiB.
    try:
        vmem = pltpu.get_tpu_info().vmem_capacity_bytes
    except Exception:
        vmem = 64 * _MIB  # conservative: v7x per-TC VMEM
    return int(min(8 * _MIB, max(2 * _MIB, vmem // 16)))


def _pick_cols(n, max_cols):
    """Largest multiple of 128 that exactly divides n (<= max_cols), or 0."""
    c = (max_cols // 128) * 128
    while c >= 128:
        if n % c == 0:
            return c
        c -= 128
    return 0


def h_sigmoid(x, *, min_pallas_elements=1 << 20, tile_rows=None, max_cols=2048):
    """Elementwise hard-sigmoid matching torch: ReLU6(x + 3) / 6. Any shape."""
    n = x.size
    if n == 0:
        return x

    # Small inputs: one grid step can't amortize launch overhead; let XLA fuse.
    if n < min_pallas_elements:
        return _h_sigmoid_jax(x)

    cols = _pick_cols(n, max_cols)
    if cols == 0:
        # Element count not a multiple of 128: padding would add a full extra
        # HBM pass, so the fused XLA elementwise op is the better tool.
        return _h_sigmoid_jax(x)

    rows = n // cols
    dtype = x.dtype
    itemsize = jnp.dtype(dtype).itemsize
    sublane = max(8, 32 // itemsize)  # 8 for f32, 16 for bf16, 32 for int8

    if tile_rows is None:
        tile_rows = max(sublane, _target_tile_bytes() // (cols * itemsize))

    if tile_rows >= rows:
        tr = rows                    # single full-height block (always legal)
        grid = (1,)
    else:
        tr = max(sublane, (tile_rows // sublane) * sublane)
        grid = (pl.cdiv(rows, tr),)  # partial boundary block is masked by Pallas

    x2d = x.reshape(rows, cols)      # contiguous reshape: no data movement
    tile_bytes = tr * cols * itemsize
    vmem_limit = int(min(128 * _MIB, max(32 * _MIB, 6 * tile_bytes)))

    out2d = pl.pallas_call(
        _h_sigmoid_kernel,
        out_shape=jax.ShapeDtypeStruct((rows, cols), dtype),
        grid_spec=pltpu.PrefetchScalarGridSpec(
            num_scalar_prefetch=0,
            grid=grid,
            in_specs=[pl.BlockSpec((tr, cols), lambda i: (i, 0))],
            out_specs=pl.BlockSpec((tr, cols), lambda i: (i, 0)),
        ),
        compiler_params=pltpu.CompilerParams(
            dimension_semantics=("parallel",),
            vmem_limit_bytes=vmem_limit,
        ),
    )(x2d)

    return out2d.reshape(x.shape)


if __name__ == "__main__":
    key = jax.random.PRNGKey(0)
    k1, k2, k3 = jax.random.split(key, 3)

    # NCHW activation, consistent with the module's use inside a conv net.
    x = jax.random.normal(k1, (2, 4, 16, 16), dtype=jnp.float32) * 4.0
    y = jax.block_until_ready(h_sigmoid(x, min_pallas_elements=0))  # force Pallas path
    ref = jnp.clip(x + 3.0, 0.0, 6.0) / 6.0
    assert y.shape == x.shape and y.dtype == x.dtype
    assert jnp.allclose(y, ref, atol=1e-6, rtol=1e-6)

    # Exercise row-boundary masking: rows=12 with row tile 8 (partial last block).
    x2 = jax.random.normal(k2, (3, 4, 32, 32), dtype=jnp.float32) * 4.0
    y2 = jax.block_until_ready(
        h_sigmoid(x2, min_pallas_elements=0, tile_rows=8, max_cols=1024))
    ref2 = jnp.clip(x2 + 3.0, 0.0, 6.0) / 6.0
    assert jnp.allclose(y2, ref2, atol=1e-6, rtol=1e-6)

    # Non-multiple-of-128 element count takes the fused-XLA fallback path.
    x3 = jax.random.normal(k3, (2, 3, 7, 5), dtype=jnp.float32) * 4.0
    y3 = jax.block_until_ready(h_sigmoid(x3, min_pallas_elements=0))
    ref3 = jnp.clip(x3 + 3.0, 0.0, 6.0) / 6.0
    assert jnp.allclose(y3, ref3, atol=1e-6, rtol=1e-6)

    print("KERNEL_OK")
</pallas_src>

<mosaic_0001>
module attributes {stable_mosaic.version = 11 : i64} {
  func.func @_h_sigmoid_kernel(%arg0: i32, %arg1: memref<1x2048xf32, #tpu.memory_space<vmem>>, %arg2: memref<1x2048xf32, #tpu.memory_space<vmem>>) attributes {dimension_semantics = [#tpu.dimension_semantics<parallel>], iteration_bounds = array<i64: 1>, scalar_prefetch = 0 : i64, scratch_operands = 0 : i64, tpu.core_type = #tpu.core_type<tc>, window_params = [{transform_indices = @transform_0, window_bounds = array<i64: 1, 2048>}, {transform_indices = @transform_1, window_bounds = array<i64: 1, 2048>}]} {
    %c0 = arith.constant 0 : index
    %c0_0 = arith.constant 0 : index
    %0 = vector.load %arg1[%c0, %c0_0] : memref<1x2048xf32, #tpu.memory_space<vmem>>, vector<1x2048xf32>
    %cst = arith.constant 3.000000e+00 : f32
    %1 = vector.broadcast %cst : f32 to vector<1x2048xf32>
    %2 = arith.addf %0, %1 : vector<1x2048xf32>
    %cst_1 = arith.constant 0.000000e+00 : f32
    %cst_2 = arith.constant 6.000000e+00 : f32
    %3 = vector.broadcast %cst_1 : f32 to vector<1x2048xf32>
    %4 = arith.maximumf %3, %2 : vector<1x2048xf32>
    %5 = vector.broadcast %cst_2 : f32 to vector<1x2048xf32>
    %6 = arith.minimumf %5, %4 : vector<1x2048xf32>
    %cst_3 = arith.constant 0.166666672 : f32
    %7 = vector.broadcast %cst_3 : f32 to vector<1x2048xf32>
    %8 = arith.mulf %6, %7 : vector<1x2048xf32>
    %c0_4 = arith.constant 0 : index
    %c0_5 = arith.constant 0 : index
    %9 = vector.load %arg2[%c0_4, %c0_5] : memref<1x2048xf32, #tpu.memory_space<vmem>>, vector<1x2048xf32>
    tpu.vector_store %arg2[%c0_4, %c0_5], %8 {strides = array<i32>} : memref<1x2048xf32, #tpu.memory_space<vmem>>, vector<1x2048xf32>,
    return
  }
  func.func @transform_0(%arg0: i32) -> (i32, i32) {
    %c0_i32 = arith.constant 0 : i32
    %c0_i32_0 = arith.constant 0 : i32
    return %arg0, %c0_i32 : i32, i32
  }
  func.func @transform_1(%arg0: i32) -> (i32, i32) {
    %c0_i32 = arith.constant 0 : i32
    %c0_i32_0 = arith.constant 0 : i32
    return %arg0, %c0_i32 : i32, i32
  }
}

</mosaic_0001>

<llo_original>
// kernel: tpu_custom_call.1
$region0: #{tpu_custom_call.1}
  #allocation0 [shape = 'u32[]', space=smem, size = 0x4, offset = 0x4, fixed_abs, tag = 'smem constant byte address 0x4 - core index']
  #allocation1 [shape = 'u32[144,128]{1,0:T(1,128)}', space=vmem, size = 0x12000, scoped, tag = 'internal scratch']
  %s0 = inlined_call_operand.hbm [shape: f32[1,2048], index: 0, kind: input, shape index: {}]
  %s1 = inlined_call_operand.hbm [shape: f32[1,2048], index: 1, kind: output, shape index: {}]
  %s2 = sld [smem:[#allocation0]]
  $region18: #{tpu_custom_call.1} parent=0
    _
  %s4 = ssub.s32 1, %s2
  %s5 = scalar_select 0, %s4, %s2
  $region1: #{tpu_custom_call.1} parent=0
    #allocation2 [shape = 'u8[8192]{0}', space=vmem, size = 0x2000, scoped, tag = 'input window, operand 0, single buffered']
    #allocation3 [shape = 's32[1]{0}', space=sflag, size = 0x4, scoped, tag = 'scoped memory for tpu_custom_call.1']
    #allocation4 [shape = 's32[1]{0}', space=sflag, size = 0x4, scoped, tag = 'scoped memory for tpu_custom_call.1']
    #allocation5 [shape = 'u8[8192]{0}', space=vmem, size = 0x2000, scoped, tag = 'output window, operand 0, single buffered']
    %6 = vsyncpa [#allocation3], 0
    %7 = vsyncpa [#allocation4], 0
    // Predicated region
    $region2: #{tpu_custom_call.1} parent=1 // pred_check
      _
    $region3: #{tpu_custom_call.1} parent=1 // pred_check_branch
      %9 = sbr.rel (0) target = $region5
    $region4: #{tpu_custom_call.1} parent=1 // pred_region
      %s11 = ssub.s32 256, 256
      %12 = vsyncadd [#allocation3], %s11
      %s14 = sshll.u32 [#allocation2], 4
      %s15 = int_to_ptr.vmem [resolvable:$true] %s14
      %17 = dma.hbm_to_vmem [thread:$0]  %s0, 256, %s15, [#allocation3]
    $region5: #{tpu_custom_call.1} parent=1 // pred_fallthru
      _
    // Predicated region
    $region6: #{tpu_custom_call.1} parent=1 // pred_check
      _
    $region7: #{tpu_custom_call.1} parent=1 // pred_check_branch
      %19 = sbr.rel (0) target = $region9
    $region8: #{tpu_custom_call.1} parent=1 // pred_region
      %20 = dma.done [#allocation3], 256
    $region9: #{tpu_custom_call.1} parent=1 // pred_fallthru
      _
    %v21 = vld [vmem:[#allocation2] sm:$0xff]
    %v22 = vld [vmem:[#allocation2 + $0x8] sm:$0xff]
    %v23 = vadd.f32 %v21, 3.0
    %v24 = vadd.f32 %v22, 3.0
    %v25 = vmax.f32 %v23, 0.0
    %v26 = vmax.f32 %v24, 0.0
    %v27 = vmin.f32 %v25, 6.0
    %v28 = vmin.f32 %v26, 6.0
    %v29 = vmul.f32 %v27, 0.16666667
    %v30 = vmul.f32 %v28, 0.16666667
    %31 = vst [vmem:[#allocation5] sm:$0xff] %v29
    %32 = vst [vmem:[#allocation5 + $0x8] sm:$0xff] %v30
    // Predicated region
    $region10: #{tpu_custom_call.1} parent=1 // pred_check
      _
    $region11: #{tpu_custom_call.1} parent=1 // pred_check_branch
      %34 = sbr.rel (0) target = $region13
    $region12: #{tpu_custom_call.1} parent=1 // pred_region
      %s36 = ssub.s32 256, 256
      %37 = vsyncadd [#allocation4], %s36
      %s39 = sshll.u32 [#allocation5], 4
      %s40 = int_to_ptr.vmem [resolvable:$true] %s39
      %42 = dma.vmem_to_hbm [thread:$0]  %s40, 256, %s1, [#allocation4]
    $region13: #{tpu_custom_call.1} parent=1 // pred_fallthru
      _
    // Predicated region
    $region14: #{tpu_custom_call.1} parent=1 // pred_check
      _
    $region15: #{tpu_custom_call.1} parent=1 // pred_check_branch
      %44 = sbr.rel (0) target = $region17
    $region16: #{tpu_custom_call.1} parent=1 // pred_region
      %45 = dma.done [#allocation4], 256
    $region17: #{tpu_custom_call.1} parent=1 // pred_fallthru
      _
    %46 = vsyncpa [#allocation3], 1
    %47 = vsyncpa [#allocation4], 1

</llo_original>
